<compile_context>
chip_gen: v7x
topology: tpu7x:2x2x1
jax: 0.10.0
libtpu: 0.0.40
codegen_flags: <defaults>
</compile_context>

<pallas_src>
import jax
import jax.numpy as jnp
from jax.experimental import pallas as pl
from jax.experimental.pallas import tpu as pltpu

NUM_EMBEDDINGS = 4
EMBED_DIM = 128
DEFAULT_TILE_N = 1024  # ~0.5 MiB f32 output block, double-buffered -> ~1 MiB


def _round_up(x: int, m: int) -> int:
    return ((x + m - 1) // m) * m


def _embedding_kernel(labels_ref, table_ref, out_ref):
    # labels_ref: (TILE_N, 1)   int32   in VMEM
    # table_ref : (4, 128)      float32 in VMEM (resident across all tiles)
    # out_ref   : (TILE_N, 128) float32 in VMEM
    labels = labels_ref[...]          # (TILE_N, 1)
    t = table_ref[...]                # (4, 128)
    # 4-way VPU select chain; (TILE_N,1) broadcasts along lanes, (1,128) along
    # sublanes. Out-of-range ids fall through to row 3 (PyTorch would raise;
    # inputs are assumed valid, matching nn.Embedding's contract).
    out_ref[...] = jnp.where(
        labels == 0, t[0:1, :],
        jnp.where(labels == 1, t[1:2, :],
                  jnp.where(labels == 2, t[2:3, :], t[3:4, :])))


def emotion_embedding(emotion_label: jax.Array, table: jax.Array,
                      *, tile_n: int = DEFAULT_TILE_N) -> jax.Array:
    """Equivalent of EmotionModel().forward(emotion_label).

    emotion_label: int array of shape (N,) (scalar also accepted), values in [0, 4).
    table: (NUM_EMBEDDINGS, EMBED_DIM) float32 embedding weights.
    Returns (N, EMBED_DIM) float32 (or (EMBED_DIM,) for scalar input).
    """
    scalar_input = emotion_label.ndim == 0
    labels = jnp.atleast_1d(emotion_label).astype(jnp.int32)
    n = labels.shape[0]

    # Tile size: multiple of 8 (sublane), capped at DEFAULT_TILE_N.
    tile = min(tile_n, _round_up(n, 8))
    padded_n = _round_up(n, tile)
    if padded_n != n:
        # Pad with label 0 (a valid row); padded rows are sliced off below.
        labels = jnp.pad(labels, (0, padded_n - n))
    labels2d = labels.reshape(padded_n, 1)

    grid = (padded_n // tile,)

    out = pl.pallas_call(
        _embedding_kernel,
        out_shape=jax.ShapeDtypeStruct((padded_n, EMBED_DIM), jnp.float32),
        grid_spec=pl.GridSpec(
            grid=grid,
            in_specs=[
                # Per-tile slice of the labels.
                pl.BlockSpec((tile, 1), lambda i: (i, 0)),
                # Whole 4x128 table resident for every tile.
                pl.BlockSpec((NUM_EMBEDDINGS, EMBED_DIM), lambda i: (0, 0)),
            ],
            out_specs=pl.BlockSpec((tile, EMBED_DIM), lambda i: (i, 0)),
        ),
        compiler_params=pltpu.CompilerParams(
            # Independent tiles -> megacore sharding on v7x; no-op on v5e/v6e.
            dimension_semantics=("parallel",),
        ),
        cost_estimate=pl.CostEstimate(
            flops=0,
            transcendentals=0,
            bytes_accessed=padded_n * (4 + 4 * EMBED_DIM)
            + NUM_EMBEDDINGS * EMBED_DIM * 4,
        ),
    )(labels2d, table)

    out = out[:n]
    if scalar_input:
        return out[0]
    return out


def init_params(key: jax.Array) -> jax.Array:
    # nn.Embedding default init: weights ~ N(0, 1)
    return jax.random.normal(key, (NUM_EMBEDDINGS, EMBED_DIM), dtype=jnp.float32)


if __name__ == "__main__":
    key = jax.random.PRNGKey(0)
    k_table, k_labels = jax.random.split(key)

    table = init_params(k_table)

    # emotion_map = {'happy': 0, 'sad': 1, 'angry': 2, 'neutral': 3}
    # batch of seq=8 emotion labels
    labels = jax.random.randint(k_labels, (8,), 0, NUM_EMBEDDINGS, dtype=jnp.int32)

    out = emotion_embedding(labels, table)
    out = jax.block_until_ready(out)

    # correctness check vs plain JAX gather (the PyTorch reference semantics)
    ref = table[labels]
    assert out.shape == (8, EMBED_DIM)
    assert jnp.allclose(out, ref, atol=1e-6), "mismatch vs reference gather"

    # scalar input path (EmotionModel.get_emotion_embedding semantics)
    out_scalar = emotion_embedding(jnp.array(2, dtype=jnp.int32), table)
    out_scalar = jax.block_until_ready(out_scalar)
    assert out_scalar.shape == (EMBED_DIM,)
    assert jnp.allclose(out_scalar, table[2], atol=1e-6), "scalar mismatch"

    print("KERNEL_OK")
</pallas_src>

<mosaic_0001>
module attributes {stable_mosaic.version = 11 : i64} {
  func.func @_embedding_kernel(%arg0: i32, %arg1: memref<8x1xi32, #tpu.memory_space<vmem>>, %arg2: memref<4x128xf32, #tpu.memory_space<vmem>>, %arg3: memref<8x128xf32, #tpu.memory_space<vmem>>) attributes {dimension_semantics = [#tpu.dimension_semantics<parallel>], iteration_bounds = array<i64: 1>, scalar_prefetch = 0 : i64, scratch_operands = 0 : i64, tpu.core_type = #tpu.core_type<tc>, window_params = [{transform_indices = @transform_0, window_bounds = array<i64: 8, 1>}, {pipeline_mode = #tpu.pipeline_mode<synchronous>, transform_indices = @transform_1, window_bounds = array<i64: 4, 128>}, {transform_indices = @transform_2, window_bounds = array<i64: 8, 128>}]} {
    %c0 = arith.constant 0 : index
    %c0_0 = arith.constant 0 : index
    %0 = vector.load %arg1[%c0, %c0_0] : memref<8x1xi32, #tpu.memory_space<vmem>>, vector<8x1xi32>
    %c0_1 = arith.constant 0 : index
    %c0_2 = arith.constant 0 : index
    %1 = vector.load %arg2[%c0_1, %c0_2] : memref<4x128xf32, #tpu.memory_space<vmem>>, vector<4x128xf32>
    %c0_i32 = arith.constant 0 : i32
    %2 = vector.broadcast %c0_i32 : i32 to vector<8x1xi32>
    %3 = arith.cmpi eq, %0, %2 : vector<8x1xi32>
    %4 = vector.extract_strided_slice %1 {offsets = [0, 0], sizes = [1, 128], strides = [1, 1]} : vector<4x128xf32> to vector<1x128xf32>
    %c1_i32 = arith.constant 1 : i32
    %5 = vector.broadcast %c1_i32 : i32 to vector<8x1xi32>
    %6 = arith.cmpi eq, %0, %5 : vector<8x1xi32>
    %7 = vector.extract_strided_slice %1 {offsets = [1, 0], sizes = [1, 128], strides = [1, 1]} : vector<4x128xf32> to vector<1x128xf32>
    %c2_i32 = arith.constant 2 : i32
    %8 = vector.broadcast %c2_i32 : i32 to vector<8x1xi32>
    %9 = arith.cmpi eq, %0, %8 : vector<8x1xi32>
    %10 = vector.extract_strided_slice %1 {offsets = [2, 0], sizes = [1, 128], strides = [1, 1]} : vector<4x128xf32> to vector<1x128xf32>
    %11 = vector.extract_strided_slice %1 {offsets = [3, 0], sizes = [1, 128], strides = [1, 1]} : vector<4x128xf32> to vector<1x128xf32>
    %12 = vector.shape_cast %9 : vector<8x1xi1> to vector<8x1xi1>
    %13 = vector.broadcast %12 : vector<8x1xi1> to vector<8x128xi1>
    %14 = vector.shape_cast %10 : vector<1x128xf32> to vector<1x128xf32>
    %15 = vector.broadcast %14 : vector<1x128xf32> to vector<8x128xf32>
    %16 = vector.shape_cast %11 : vector<1x128xf32> to vector<1x128xf32>
    %17 = vector.broadcast %16 : vector<1x128xf32> to vector<8x128xf32>
    %18 = arith.select %13, %15, %17 : vector<8x128xi1>, vector<8x128xf32>
    %19 = vector.shape_cast %6 : vector<8x1xi1> to vector<8x1xi1>
    %20 = vector.broadcast %19 : vector<8x1xi1> to vector<8x128xi1>
    %21 = vector.shape_cast %7 : vector<1x128xf32> to vector<1x128xf32>
    %22 = vector.broadcast %21 : vector<1x128xf32> to vector<8x128xf32>
    %23 = arith.select %20, %22, %18 : vector<8x128xi1>, vector<8x128xf32>
    %24 = vector.shape_cast %3 : vector<8x1xi1> to vector<8x1xi1>
    %25 = vector.broadcast %24 : vector<8x1xi1> to vector<8x128xi1>
    %26 = vector.shape_cast %4 : vector<1x128xf32> to vector<1x128xf32>
    %27 = vector.broadcast %26 : vector<1x128xf32> to vector<8x128xf32>
    %28 = arith.select %25, %27, %23 : vector<8x128xi1>, vector<8x128xf32>
    %c0_3 = arith.constant 0 : index
    %c0_4 = arith.constant 0 : index
    %29 = vector.load %arg3[%c0_3, %c0_4] : memref<8x128xf32, #tpu.memory_space<vmem>>, vector<8x128xf32>
    tpu.vector_store %arg3[%c0_3, %c0_4], %28 {strides = array<i32>} : memref<8x128xf32, #tpu.memory_space<vmem>>, vector<8x128xf32>,
    return
  }
  func.func @transform_0(%arg0: i32) -> (i32, i32) {
    %c0_i32 = arith.constant 0 : i32
    %c0_i32_0 = arith.constant 0 : i32
    return %arg0, %c0_i32 : i32, i32
  }
  func.func @transform_1(%arg0: i32) -> (i32, i32) {
    %c0_i32 = arith.constant 0 : i32
    %c0_i32_0 = arith.constant 0 : i32
    %c0_i32_1 = arith.constant 0 : i32
    return %c0_i32, %c0_i32_0 : i32, i32
  }
  func.func @transform_2(%arg0: i32) -> (i32, i32) {
    %c0_i32 = arith.constant 0 : i32
    %c0_i32_0 = arith.constant 0 : i32
    return %arg0, %c0_i32 : i32, i32
  }
}

</mosaic_0001>

<llo_original>
// kernel: tpu_custom_call.1
$region0: #{tpu_custom_call.1}
  #allocation0 [shape = 'u32[]', space=smem, size = 0x4, offset = 0x4, fixed_abs, tag = 'smem constant byte address 0x4 - core index']
  #allocation1 [shape = 'u32[144,128]{1,0:T(1,128)}', space=vmem, size = 0x12000, scoped, tag = 'internal scratch']
  %s0 = inlined_call_operand.vmem [shape: s32[8,1], index: 0, kind: input, shape index: {}]
  %s1 = inlined_call_operand.vmem [shape: f32[4,128], index: 1, kind: input, shape index: {}]
  %s2 = inlined_call_operand.hbm [shape: f32[8,128], index: 2, kind: output, shape index: {}]
  %s3 = sld [smem:[#allocation0]]
  $region18: #{tpu_custom_call.1} parent=0
    _
  %s5 = ssub.s32 1, %s3
  %s6 = scalar_select 0, %s5, %s3
  $region1: #{tpu_custom_call.1} parent=0
    #allocation2 [shape = 'u8[4096]{0}', space=vmem, size = 0x1000, scoped, tag = 'output window, operand 0, single buffered']
    #allocation3 [shape = 's32[1]{0}', space=sflag, size = 0x4, scoped, tag = 'scoped memory for tpu_custom_call.1']
    %7 = vsyncpa [#allocation3], 0
    // Predicated region
    $region2: #{tpu_custom_call.1} parent=1 // pred_check
      _
    $region3: #{tpu_custom_call.1} parent=1 // pred_check_branch
      %9 = sbr.rel (0) target = $region5
    $region4: #{tpu_custom_call.1} parent=1 // pred_region
      _
    $region5: #{tpu_custom_call.1} parent=1 // pred_fallthru
      _
    // Predicated region
    $region6: #{tpu_custom_call.1} parent=1 // pred_check
      _
    $region7: #{tpu_custom_call.1} parent=1 // pred_check_branch
      %11 = sbr.rel (0) target = $region9
    $region8: #{tpu_custom_call.1} parent=1 // pred_region
      _
    $region9: #{tpu_custom_call.1} parent=1 // pred_fallthru
      _
    %v12 = vld [vmem:[%s0] sm:$0xff]
    %v13 = vld [vmem:[%s1] sm:$0xf]
    %vm14 = vcmp.eq.s32.totalorder %v12, 0
    %vm15 = vcmp.eq.s32.totalorder %v12, 1
    %vm16 = vcmp.eq.s32.totalorder %v12, 2
    %v17 = vsel %vm16, 1, 0
    %18 = vset.pattern.permute.xlu0 0
    %19 = vperm.xlu0 %18, %v17
    %v20 = vpop.permute.xlu0 %19
    %vm21 = vcmp.eq.s32.totalorder %v20, 1
    %v22 = vlaneseq
    %v23 = vshrl.u32 %v22, 7
    %v24 = vsub.s32 2, %v23
    %v25 = vrot.slane %v13, %v24
    %v26 = vlaneseq
    %v27 = vshrl.u32 %v26, 7
    %v28 = vsub.s32 3, %v27
    %v29 = vrot.slane %v13, %v28
    %v30 = vsel %vm21, %v25, %v29
    %v31 = vsel %vm15, 1, 0
    %32 = vset.pattern.permute.xlu0 0
    %33 = vperm.xlu0 %32, %v31
    %v34 = vpop.permute.xlu0 %33
    %vm35 = vcmp.eq.s32.totalorder %v34, 1
    %v36 = vlaneseq
    %v37 = vshrl.u32 %v36, 7
    %v38 = vsub.s32 1, %v37
    %v39 = vrot.slane %v13, %v38
    %v40 = vsel %vm35, %v39, %v30
    %v41 = vsel %vm14, 1, 0
    %42 = vset.pattern.permute.xlu0 0
    %43 = vperm.xlu0 %42, %v41
    %v44 = vpop.permute.xlu0 %43
    %vm45 = vcmp.eq.s32.totalorder %v44, 1
    %v46 = vlaneseq
    %v47 = vshrl.u32 %v46, 7
    %v48 = vsub.s32 0, %v47
    %v49 = vrot.slane %v13, %v48
    %v50 = vsel %vm45, %v49, %v40
    %51 = vst [vmem:[#allocation2] sm:$0xff] %v50
    // Predicated region
    $region10: #{tpu_custom_call.1} parent=1 // pred_check
      _
    $region11: #{tpu_custom_call.1} parent=1 // pred_check_branch
      %53 = sbr.rel (0) target = $region13
    $region12: #{tpu_custom_call.1} parent=1 // pred_region
      %s55 = ssub.s32 128, 128
      %56 = vsyncadd [#allocation3], %s55
      %s58 = sshll.u32 [#allocation2], 4
      %s59 = int_to_ptr.vmem [resolvable:$true] %s58
      %61 = dma.vmem_to_hbm [thread:$0]  %s59, 128, %s2, [#allocation3]
    $region13: #{tpu_custom_call.1} parent=1 // pred_fallthru
      _
    // Predicated region
    $region14: #{tpu_custom_call.1} parent=1 // pred_check
      _
    $region15: #{tpu_custom_call.1} parent=1 // pred_check_branch
      %63 = sbr.rel (0) target = $region17
    $region16: #{tpu_custom_call.1} parent=1 // pred_region
      %64 = dma.done [#allocation3], 128
    $region17: #{tpu_custom_call.1} parent=1 // pred_fallthru
      _
    %65 = vsyncpa [#allocation3], 1

</llo_original>
